<compile_context>
chip_gen: v5e
topology: v5e:2x2
jax: 0.10.0
libtpu: 0.0.40
codegen_flags: <defaults>
</compile_context>

<pallas_src>
import functools

import jax
import jax.numpy as jnp
from jax.experimental import pallas as pl
from jax.experimental.pallas import tpu as pltpu


_LANE = 128           # last dim of every block padded to a multiple of 128
_SUBLANE = 8          # f32 sublane width: batch dim padded to a multiple of 8
_MAX_TILE_B = 1024    # bigger batch tiles amortize ~0.35us/step overhead
_MIN_PARALLEL_ROWS = 16   # batches >= this get >=2 grid steps (v7x megacore)

# Lazily probed: does pipeline_mode=pl.Buffered(1) lower on this jax/TPU?
_WEIGHT_SINGLE_BUFFER_OK = None


def _round_up(n: int, m: int) -> int:
    return ((n + m - 1) // m) * m


def _cdiv(a: int, b: int) -> int:
    return (a + b - 1) // b


def _mlp_kernel(*refs, num_layers: int, compute_dtype):
    """Fused MLP: o = Linear_L(ReLU(... ReLU(Linear_1(x)) ...)).

    refs = (x_ref, w0, b0, w1, b1, ..., o_ref). Intermediates live in
    vregs/VMEM; nothing goes back to HBM between layers.
    """
    x_ref = refs[0]
    o_ref = refs[-1]
    wb = refs[1:-1]

    x = x_ref[...]                                 # compute_dtype (bf16/f32)
    for i in range(num_layers):
        w = wb[2 * i][...]                         # compute_dtype
        b = wb[2 * i + 1][...]                     # (1, out_p) f32, broadcasts
        y = jnp.dot(x, w, preferred_element_type=jnp.float32) + b
        if i != num_layers - 1:                    # ReLU except after last layer
            x = jnp.maximum(y, 0.0).astype(compute_dtype)
        else:
            x = y                                  # keep f32 for the store
    o_ref[...] = x.astype(o_ref.dtype)


def init_qnetwork_params(key, hidden_units):
    """Init mimicking torch.nn.Linear default U[-1/sqrt(in), 1/sqrt(in)].

    Returns a list of (W, b) with W stored as (in_features, out_features).
    """
    params = []
    for i in range(len(hidden_units) - 1):
        fan_in, fan_out = hidden_units[i], hidden_units[i + 1]
        key, kw, kb = jax.random.split(key, 3)
        bound = 1.0 / jnp.sqrt(jnp.float32(fan_in))
        w = jax.random.uniform(kw, (fan_in, fan_out), jnp.float32, -bound, bound)
        b = jax.random.uniform(kb, (1, fan_out), jnp.float32, -bound, bound)
        params.append((w, b))
    return params


def prepare_qnetwork_params(params, compute_dtype=jnp.bfloat16):
    """Pad (lane-dense) and cast the weights ONCE, hoisted out of forward.

    Weights -> compute_dtype (bf16 default, halves HBM bytes + native MXU on
    v6e/v7x); biases stay f32 (bias add / ReLU / output are done in f32).
    """
    layers = []
    for (w, b) in params:
        fin, fout = w.shape
        fin_p = _round_up(fin, _LANE)
        fout_p = _round_up(fout, _LANE)
        w_p = jnp.pad(w, ((0, fin_p - fin), (0, fout_p - fout))).astype(compute_dtype)
        b_p = jnp.pad(jnp.asarray(b).reshape(1, -1),
                      ((0, 0), (0, fout_p - fout))).astype(jnp.float32)
        layers.append((w_p, b_p))
    return {
        "layers": layers,
        "in_features": params[0][0].shape[0],
        "out_features": params[-1][0].shape[1],
        "compute_dtype": compute_dtype,
    }


def _qnetwork_forward_impl(prepared, state, *, single_buffer_weights):
    layers = prepared["layers"]
    compute_dtype = prepared["compute_dtype"]
    num_layers = len(layers)
    in_features = prepared["in_features"]
    out_features = prepared["out_features"]

    B = state.shape[0]
    assert state.shape[1] == in_features

    in_pad = layers[0][0].shape[0]
    out_pad = layers[-1][0].shape[1]

    # --- balanced batch tiling (parallel grid axis) -----------------------
    # * tile_b picked to minimize last-tile padding (no 83%-zero tiles)
    # * >=2 steps once B >= 16 rows so v7x's two TensorCores can split the
    #   batch (negligible cost on 1-TC v5e/v6e).
    b_min = _round_up(B, _SUBLANE)
    n_tiles = _cdiv(b_min, _MAX_TILE_B)
    if B >= _MIN_PARALLEL_ROWS:
        n_tiles = max(n_tiles, 2)
    tile_b = _round_up(_cdiv(b_min, n_tiles), _SUBLANE)
    b_pad = _round_up(B, tile_b)
    grid = (b_pad // tile_b,)

    # Only the (tiny) activation is padded per call; weights are pre-padded.
    x = jnp.pad(state.astype(compute_dtype),
                ((0, b_pad - B), (0, in_pad - in_features)))

    act_bytes = jnp.dtype(compute_dtype).itemsize
    wt_kwargs = {"pipeline_mode": pl.Buffered(1)} if single_buffer_weights else {}
    wb_buffers = 1 if single_buffer_weights else 2

    in_specs = [pl.BlockSpec((tile_b, in_pad), lambda i: (i, 0),
                             memory_space=pltpu.MemorySpace.VMEM)]
    flat_wb = []
    flops = 0
    bytes_accessed = b_pad * in_pad * act_bytes
    vmem_bytes = 2 * tile_b * in_pad * act_bytes      # double-buffered x tile
    vmem_bytes += 2 * tile_b * out_pad * 4            # double-buffered out tile
    for (w_p, b_p) in layers:
        fin_p, fout_p = w_p.shape
        flat_wb.append(w_p)
        flat_wb.append(b_p)
        # Constant index map -> weight/bias resident across the whole grid.
        in_specs.append(pl.BlockSpec((fin_p, fout_p), lambda i: (0, 0),
                                     memory_space=pltpu.MemorySpace.VMEM,
                                     **wt_kwargs))
        in_specs.append(pl.BlockSpec((1, fout_p), lambda i: (0, 0),
                                     memory_space=pltpu.MemorySpace.VMEM,
                                     **wt_kwargs))
        flops += 2 * b_pad * fin_p * fout_p
        bytes_accessed += fin_p * fout_p * act_bytes + fout_p * 4
        vmem_bytes += wb_buffers * (fin_p * fout_p * act_bytes
                                    + _SUBLANE * fout_p * 4)
        vmem_bytes += tile_b * fout_p * 4             # f32 intermediate slab
    bytes_accessed += b_pad * out_pad * 4

    # Explicit scoped-VMEM budget: blocks + 50% headroom, 32 MiB floor
    # (>= default scoped limits), capped well under physical VMEM.
    vmem_limit = min(max(int(vmem_bytes * 1.5), 32 << 20), 128 << 20)

    out_specs = pl.BlockSpec((tile_b, out_pad), lambda i: (i, 0),
                             memory_space=pltpu.MemorySpace.VMEM)

    kernel = functools.partial(_mlp_kernel, num_layers=num_layers,
                               compute_dtype=compute_dtype)
    y = pl.pallas_call(
        kernel,
        out_shape=jax.ShapeDtypeStruct((b_pad, out_pad), jnp.float32),
        grid=grid,
        in_specs=in_specs,
        out_specs=out_specs,
        compiler_params=pltpu.CompilerParams(
            dimension_semantics=("parallel",),
            vmem_limit_bytes=vmem_limit),
        cost_estimate=pl.CostEstimate(
            flops=int(flops), transcendentals=0,
            bytes_accessed=int(bytes_accessed)),
    )(x, *flat_wb)

    # Strip batch/lane padding back to the logical shape.
    return y[:B, :out_features]


def qnetwork_forward(prepared, state):
    """Fused Pallas forward pass matching QNetwork.forward semantics.

    prepared: output of prepare_qnetwork_params (padding hoisted out of the
              per-call path).
    state:    (batch, state_size) float32.
    """
    global _WEIGHT_SINGLE_BUFFER_OK
    if _WEIGHT_SINGLE_BUFFER_OK is None:
        # One-time probe: single-buffer the grid-invariant weight specs if
        # this jax build supports pipeline_mode=pl.Buffered(1); otherwise
        # fall back to the (verified-working) default double-buffering.
        try:
            out = _qnetwork_forward_impl(prepared, state,
                                         single_buffer_weights=True)
            jax.block_until_ready(out)
            _WEIGHT_SINGLE_BUFFER_OK = True
            return out
        except Exception:
            _WEIGHT_SINGLE_BUFFER_OK = False
    return _qnetwork_forward_impl(
        prepared, state, single_buffer_weights=_WEIGHT_SINGLE_BUFFER_OK)


def qnetwork_forward_ref(params, state):
    """Plain-JAX f32 reference for correctness checking."""
    x = state
    n = len(params)
    for i, (w, b) in enumerate(params):
        x = x @ w + jnp.asarray(b).reshape(1, -1)
        if i != n - 1:
            x = jnp.maximum(x, 0.0)
    return x


if __name__ == "__main__":
    key = jax.random.PRNGKey(0)
    batch = 8

    # Case 1: module default — hidden_units=[64, 32]: one Linear, no ReLU.
    hidden_units = [64, 32]
    key, k_state, k_params = jax.random.split(key, 3)
    state = jax.random.normal(k_state, (batch, hidden_units[0]), jnp.float32)
    params = init_qnetwork_params(k_params, hidden_units)
    ref = qnetwork_forward_ref(params, state)

    # f32 compute path (exactness check vs the reference).
    prep_f32 = prepare_qnetwork_params(params, compute_dtype=jnp.float32)
    out_f32 = jax.block_until_ready(qnetwork_forward(prep_f32, state))
    assert out_f32.shape == (batch, hidden_units[-1])
    assert jnp.allclose(out_f32, ref, atol=1e-4, rtol=1e-4)

    # bf16 compute path (default; halves HBM bytes, f32 accumulate).
    prep_bf16 = prepare_qnetwork_params(params)
    out_bf16 = jax.block_until_ready(qnetwork_forward(prep_bf16, state))
    assert jnp.allclose(out_bf16, ref, atol=5e-2, rtol=5e-2)

    # Case 2: deeper net exercises the fused multi-layer + ReLU path.
    hidden_units2 = [64, 128, 32]
    key, k_state2, k_params2 = jax.random.split(key, 3)
    state2 = jax.random.normal(k_state2, (batch, hidden_units2[0]), jnp.float32)
    params2 = init_qnetwork_params(k_params2, hidden_units2)
    prep2 = prepare_qnetwork_params(params2)
    out2 = jax.block_until_ready(qnetwork_forward(prep2, state2))
    ref2 = qnetwork_forward_ref(params2, state2)
    assert out2.shape == (batch, hidden_units2[-1])
    assert jnp.allclose(out2, ref2, atol=5e-2, rtol=5e-2)

    # Case 3: larger batch exercises balanced multi-tile "parallel" grid
    # (>= 2 steps so a v7x megacore can split the batch; minimal padding).
    batch3 = 600
    key, k_state3 = jax.random.split(key)
    state3 = jax.random.normal(k_state3, (batch3, hidden_units2[0]), jnp.float32)
    out3 = jax.block_until_ready(qnetwork_forward(prep2, state3))
    ref3 = qnetwork_forward_ref(params2, state3)
    assert out3.shape == (batch3, hidden_units2[-1])
    assert jnp.allclose(out3, ref3, atol=5e-2, rtol=5e-2)

    print("KERNEL_OK")
</pallas_src>

<mosaic_0001>
module attributes {stable_mosaic.version = 11 : i64} {
  func.func @_mlp_kernel(%arg0: i32, %arg1: memref<8x128xf32, #tpu.memory_space<vmem>>, %arg2: memref<128x128xf32, #tpu.memory_space<vmem>>, %arg3: memref<1x128xf32, #tpu.memory_space<vmem>>, %arg4: memref<8x128xf32, #tpu.memory_space<vmem>>) attributes {dimension_semantics = [#tpu.dimension_semantics<parallel>], iteration_bounds = array<i64: 1>, scalar_prefetch = 0 : i64, scratch_operands = 0 : i64, tpu.core_type = #tpu.core_type<tc>, window_params = [{transform_indices = @transform_0, window_bounds = array<i64: 8, 128>}, {pipeline_mode = #tpu.pipeline_mode<synchronous>, transform_indices = @transform_1, window_bounds = array<i64: 128, 128>}, {pipeline_mode = #tpu.pipeline_mode<synchronous>, transform_indices = @transform_2, window_bounds = array<i64: 1, 128>}, {transform_indices = @transform_3, window_bounds = array<i64: 8, 128>}]} {
    %c0 = arith.constant 0 : index
    %c0_0 = arith.constant 0 : index
    %0 = vector.load %arg1[%c0, %c0_0] : memref<8x128xf32, #tpu.memory_space<vmem>>, vector<8x128xf32>
    %c0_1 = arith.constant 0 : index
    %c0_2 = arith.constant 0 : index
    %1 = vector.load %arg2[%c0_1, %c0_2] : memref<128x128xf32, #tpu.memory_space<vmem>>, vector<128x128xf32>
    %c0_3 = arith.constant 0 : index
    %c0_4 = arith.constant 0 : index
    %2 = vector.load %arg3[%c0_3, %c0_4] : memref<1x128xf32, #tpu.memory_space<vmem>>, vector<1x128xf32>
    %cst = arith.constant dense<0.000000e+00> : vector<8x128xf32>
    %3 = tpu.matmul %0, %1, %cst {dimension_numbers = #tpu.dot_dimension_numbers<[1], [0], [0], [1], [0, 0, 1, 1], [], []>} : vector<8x128xf32>, vector<128x128xf32>, vector<8x128xf32> -> vector<8x128xf32>
    %4 = vector.broadcast %2 : vector<1x128xf32> to vector<8x128xf32>
    %5 = arith.addf %3, %4 : vector<8x128xf32>
    %c0_5 = arith.constant 0 : index
    %c0_6 = arith.constant 0 : index
    %6 = vector.load %arg4[%c0_5, %c0_6] : memref<8x128xf32, #tpu.memory_space<vmem>>, vector<8x128xf32>
    tpu.vector_store %arg4[%c0_5, %c0_6], %5 {strides = array<i32>} : memref<8x128xf32, #tpu.memory_space<vmem>>, vector<8x128xf32>,
    return
  }
  func.func @transform_0(%arg0: i32) -> (i32, i32) {
    %c0_i32 = arith.constant 0 : i32
    %c0_i32_0 = arith.constant 0 : i32
    return %arg0, %c0_i32 : i32, i32
  }
  func.func @transform_1(%arg0: i32) -> (i32, i32) {
    %c0_i32 = arith.constant 0 : i32
    %c0_i32_0 = arith.constant 0 : i32
    %c0_i32_1 = arith.constant 0 : i32
    return %c0_i32, %c0_i32_0 : i32, i32
  }
  func.func @transform_2(%arg0: i32) -> (i32, i32) {
    %c0_i32 = arith.constant 0 : i32
    %c0_i32_0 = arith.constant 0 : i32
    %c0_i32_1 = arith.constant 0 : i32
    return %c0_i32, %c0_i32_0 : i32, i32
  }
  func.func @transform_3(%arg0: i32) -> (i32, i32) {
    %c0_i32 = arith.constant 0 : i32
    %c0_i32_0 = arith.constant 0 : i32
    return %arg0, %c0_i32 : i32, i32
  }
}

module attributes {stable_mosaic.version = 11 : i64} {
  func.func @_mlp_kernel(%arg0: i32, %arg1: memref<8x128xf32, #tpu.memory_space<vmem>>, %arg2: memref<128x128xf32, #tpu.memory_space<vmem>>, %arg3: memref<1x128xf32, #tpu.memory_space<vmem>>, %arg4: memref<8x128xf32, #tpu.memory_space<vmem>>) attributes {dimension_semantics = [#tpu.dimension_semantics<parallel>], iteration_bounds = array<i64: 1>, scalar_prefetch = 0 : i64, scratch_operands = 0 : i64, tpu.core_type = #tpu.core_type<tc>, window_params = [{transform_indices = @transform_0, window_bounds = array<i64: 8, 128>}, {pipeline_mode = #tpu.pipeline_mode<synchronous>, transform_indices = @transform_1, window_bounds = array<i64: 128, 128>}, {pipeline_mode = #tpu.pipeline_mode<synchronous>, transform_indices = @transform_2, window_bounds = array<i64: 1, 128>}, {transform_indices = @transform_3, window_bounds = array<i64: 8, 128>}]} {
    %c0 = arith.constant 0 : index
    %c0_0 = arith.constant 0 : index
    %0 = vector.load %arg1[%c0, %c0_0] : memref<8x128xf32, #tpu.memory_space<vmem>>, vector<8x128xf32>
    %c0_1 = arith.constant 0 : index
    %c0_2 = arith.constant 0 : index
    %1 = vector.load %arg2[%c0_1, %c0_2] : memref<128x128xf32, #tpu.memory_space<vmem>>, vector<128x128xf32>
    %c0_3 = arith.constant 0 : index
    %c0_4 = arith.constant 0 : index
    %2 = vector.load %arg3[%c0_3, %c0_4] : memref<1x128xf32, #tpu.memory_space<vmem>>, vector<1x128xf32>
    %cst = arith.constant dense<0.000000e+00> : vector<8x128xf32>
    %3 = tpu.matmul %0, %1, %cst {dimension_numbers = #tpu.dot_dimension_numbers<[1], [0], [0], [1], [0, 0, 1, 1], [], []>} : vector<8x128xf32>, vector<128x128xf32>, vector<8x128xf32> -> vector<8x128xf32>
    %4 = vector.broadcast %2 : vector<1x128xf32> to vector<8x128xf32>
    %5 = arith.addf %3, %4 : vector<8x128xf32>
    %c0_5 = arith.constant 0 : index
    %c0_6 = arith.constant 0 : index
    %6 = vector.load %arg4[%c0_5, %c0_6] : memref<8x128xf32, #tpu.memory_space<vmem>>, vector<8x128xf32>
    tpu.vector_store %arg4[%c0_5, %c0_6], %5 {strides = array<i32>} : memref<8x128xf32, #tpu.memory_space<vmem>>, vector<8x128xf32>,
    return
  }
  func.func @transform_0(%arg0: i32) -> (i32, i32) {
    %c0_i32 = arith.constant 0 : i32
    %c0_i32_0 = arith.constant 0 : i32
    return %arg0, %c0_i32 : i32, i32
  }
  func.func @transform_1(%arg0: i32) -> (i32, i32) {
    %c0_i32 = arith.constant 0 : i32
    %c0_i32_0 = arith.constant 0 : i32
    %c0_i32_1 = arith.constant 0 : i32
    return %c0_i32, %c0_i32_0 : i32, i32
  }
  func.func @transform_2(%arg0: i32) -> (i32, i32) {
    %c0_i32 = arith.constant 0 : i32
    %c0_i32_0 = arith.constant 0 : i32
    %c0_i32_1 = arith.constant 0 : i32
    return %c0_i32, %c0_i32_0 : i32, i32
  }
  func.func @transform_3(%arg0: i32) -> (i32, i32) {
    %c0_i32 = arith.constant 0 : i32
    %c0_i32_0 = arith.constant 0 : i32
    return %arg0, %c0_i32 : i32, i32
  }
}

</mosaic_0001>

<llo_original>
// kernel: tpu_custom_call.1
$region0: #{tpu_custom_call.1}
  #allocation0 [shape = 'u32[]', space=smem, size = 0x4, offset = 0x4, fixed_abs, tag = 'smem constant byte address 0x4 - core index']
  #allocation1 [shape = 'u32[72,128]{1,0:T(1,128)}', space=vmem, size = 0x9000, scoped, tag = 'internal scratch']
  %s0 = inlined_call_operand.hbm [shape: f32[8,128], index: 0, kind: input, shape index: {}]
  %s1 = inlined_call_operand.hbm [shape: f32[128,128], index: 1, kind: input, shape index: {}]
  %s2 = inlined_call_operand.vmem [shape: f32[1,128], index: 2, kind: input, shape index: {}]
  %s3 = inlined_call_operand.hbm [shape: f32[8,128], index: 3, kind: output, shape index: {}]
  %s4 = sld [smem:[#allocation0]]
  $region30: #{tpu_custom_call.1} parent=0
    _
  %s6 = ssub.s32 1, %s4
  %s7 = scalar_select 0, %s6, %s4
  $region1: #{tpu_custom_call.1} parent=0
    #allocation2 [shape = 'u8[4096]{0}', space=vmem, size = 0x1000, scoped, tag = 'input window, operand 0, single buffered']
    #allocation3 [shape = 's32[1]{0}', space=sflag, size = 0x4, scoped, tag = 'scoped memory for tpu_custom_call.1']
    #allocation4 [shape = 's32[1]{0}', space=sflag, size = 0x4, scoped, tag = 'scoped memory for tpu_custom_call.1']
    #allocation5 [shape = 'u8[65536]{0}', space=vmem, size = 0x10000, scoped, tag = 'input window, operand 1, single buffered']
    #allocation6 [shape = 's32[1]{0}', space=sflag, size = 0x4, scoped, tag = 'scoped memory for tpu_custom_call.1']
    #allocation7 [shape = 'u8[4096]{0}', space=vmem, size = 0x1000, scoped, tag = 'output window, operand 0, single buffered']
    %8 = vsyncpa [#allocation3], 0
    %9 = vsyncpa [#allocation6], 0
    %10 = vsyncpa [#allocation4], 0
    // Predicated region
    $region2: #{tpu_custom_call.1} parent=1 // pred_check
      _
    $region3: #{tpu_custom_call.1} parent=1 // pred_check_branch
      %12 = sbr.rel (0) target = $region5
    $region4: #{tpu_custom_call.1} parent=1 // pred_region
      %14 = vsyncadd [#allocation3], 0
      %s16 = sshll.u32 %s0, 4
      %s17 = int_to_ptr.hbm [resolvable:$true] %s16
      %s18 = sshll.u32 [#allocation2], 4
      %s19 = int_to_ptr.vmem [resolvable:$true] %s18
      %21 = dma.hbm_to_vmem [thread:$0]  %s17, 128, %s19, [#allocation3]
    $region5: #{tpu_custom_call.1} parent=1 // pred_fallthru
      _
    // Predicated region
    $region6: #{tpu_custom_call.1} parent=1 // pred_check
      _
    $region7: #{tpu_custom_call.1} parent=1 // pred_check_branch
      %23 = sbr.rel (0) target = $region9
    $region8: #{tpu_custom_call.1} parent=1 // pred_region
      %25 = vsyncadd [#allocation6], 0
      %s26 = sshll.u32 %s1, 4
      %s27 = int_to_ptr.hbm [resolvable:$true] %s26
      %s28 = sshll.u32 [#allocation5], 4
      %s29 = int_to_ptr.vmem [resolvable:$true] %s28
      %34 = dma.hbm_to_vmem [thread:$0]  %s27, 2048, %s29, [#allocation6], 128, 128, 8
    $region9: #{tpu_custom_call.1} parent=1 // pred_fallthru
      _
    // Predicated region
    $region10: #{tpu_custom_call.1} parent=1 // pred_check
      _
    $region11: #{tpu_custom_call.1} parent=1 // pred_check_branch
      %36 = sbr.rel (0) target = $region13
    $region12: #{tpu_custom_call.1} parent=1 // pred_region
      _
    $region13: #{tpu_custom_call.1} parent=1 // pred_fallthru
      _
    // Predicated region
    $region14: #{tpu_custom_call.1} parent=1 // pred_check
      _
    $region15: #{tpu_custom_call.1} parent=1 // pred_check_branch
      %38 = sbr.rel (0) target = $region17
    $region16: #{tpu_custom_call.1} parent=1 // pred_region
      %40 = dma.done [#allocation3], 128
    $region17: #{tpu_custom_call.1} parent=1 // pred_fallthru
      _
    // Predicated region
    $region18: #{tpu_custom_call.1} parent=1 // pred_check
      _
    $region19: #{tpu_custom_call.1} parent=1 // pred_check_branch
      %42 = sbr.rel (0) target = $region21
    $region20: #{tpu_custom_call.1} parent=1 // pred_region
      %44 = dma.done [#allocation6], 2048
    $region21: #{tpu_custom_call.1} parent=1 // pred_fallthru
      _
    %v45 = vld [vmem:[#allocation2] sm:$0xff]
    %v46 = vld [vmem:[#allocation5] sm:$0xff]
    %v47 = vld [vmem:[#allocation5 + $0x8] sm:$0xff]
    %v48 = vld [vmem:[#allocation5 + $0x10] sm:$0xff]
    %v49 = vld [vmem:[#allocation5 + $0x18] sm:$0xff]
    %v50 = vld [vmem:[#allocation5 + $0x20] sm:$0xff]
    %v51 = vld [vmem:[#allocation5 + $0x28] sm:$0xff]
    %v52 = vld [vmem:[#allocation5 + $0x30] sm:$0xff]
    %v53 = vld [vmem:[#allocation5 + $0x38] sm:$0xff]
    %v54 = vld [vmem:[#allocation5 + $0x40] sm:$0xff]
    %v55 = vld [vmem:[#allocation5 + $0x48] sm:$0xff]
    %v56 = vld [vmem:[#allocation5 + $0x50] sm:$0xff]
    %v57 = vld [vmem:[#allocation5 + $0x58] sm:$0xff]
    %v58 = vld [vmem:[#allocation5 + $0x60] sm:$0xff]
    %v59 = vld [vmem:[#allocation5 + $0x68] sm:$0xff]
    %v60 = vld [vmem:[#allocation5 + $0x70] sm:$0xff]
    %v61 = vld [vmem:[#allocation5 + $0x78] sm:$0xff]
    %v62 = vld [vmem:[%s2] sm:$0x1]
    %v64 = vperm.slane %v62, 0
    %66 = vmatpush.msra.mxu0 %v61
    %67 = vmatpush.msra.mxu0 %v60
    %68 = vmatpush.msra.mxu0 %v59
    %69 = vmatpush.msra.mxu0 %v58
    %70 = vmatpush.msra.mxu0 %v57
    %71 = vmatpush.msra.mxu0 %v56
    %72 = vmatpush.msra.mxu0 %v55
    %73 = vmatpush.msra.mxu0 %v54
    %74 = vmatpush.msra.mxu0 %v53
    %75 = vmatpush.msra.mxu0 %v52
    %76 = vmatpush.msra.mxu0 %v51
    %77 = vmatpush.msra.mxu0 %v50
    %78 = vmatpush.msra.mxu0 %v49
    %79 = vmatpush.msra.mxu0 %v48
    %80 = vmatpush.msra.mxu0 %v47
    %81 = vmatpush.msra.mxu0 %v46
    %82 = vmatmul.f32.gmra.mxu0 %v45
    %v83 = vpop.f32.mrf.mxu0
    %v84 = vadd.f32 %v64, %v83
    %85 = vdwg.mxu0
    %86 = vst [vmem:[#allocation7] sm:$0xff] %v84
    // Predicated region
    $region22: #{tpu_custom_call.1} parent=1 // pred_check
      _
    $region23: #{tpu_custom_call.1} parent=1 // pred_check_branch
      %88 = sbr.rel (0) target = $region25
    $region24: #{tpu_custom_call.1} parent=1 // pred_region
      %90 = vsyncadd [#allocation4], 0
      %s92 = sshll.u32 [#allocation7], 4
      %s93 = int_to_ptr.vmem [resolvable:$true] %s92
      %s94 = sshll.u32 %s3, 4
      %s95 = int_to_ptr.hbm [resolvable:$true] %s94
      %97 = dma.vmem_to_hbm [thread:$0]  %s93, 128, %s95, [#allocation4]
    $region25: #{tpu_custom_call.1} parent=1 // pred_fallthru
      _
    // Predicated region
    $region26: #{tpu_custom_call.1} parent=1 // pred_check
      _
    $region27: #{tpu_custom_call.1} parent=1 // pred_check_branch
      %99 = sbr.rel (0) target = $region29
    $region28: #{tpu_custom_call.1} parent=1 // pred_region
      %101 = dma.done [#allocation4], 128
    $region29: #{tpu_custom_call.1} parent=1 // pred_fallthru
      _
    %102 = vsyncpa [#allocation3], 1
    %103 = vsyncpa [#allocation6], 1
    %104 = vsyncpa [#allocation4], 1

// kernel: tpu_custom_call.1
$region0: #{tpu_custom_call.1}
  #allocation0 [shape = 'u32[]', space=smem, size = 0x4, offset = 0x4, fixed_abs, tag = 'smem constant byte address 0x4 - core index']
  #allocation1 [shape = 'u32[72,128]{1,0:T(1,128)}', space=vmem, size = 0x9000, scoped, tag = 'internal scratch']
  %s0 = inlined_call_operand.hbm [shape: f32[8,128], index: 0, kind: input, shape index: {}]
  %s1 = inlined_call_operand.hbm [shape: f32[128,128], index: 1, kind: input, shape index: {}]
  %s2 = inlined_call_operand.vmem [shape: f32[1,128], index: 2, kind: input, shape index: {}]
  %s3 = inlined_call_operand.hbm [shape: f32[8,128], index: 3, kind: output, shape index: {}]
  %s4 = sld [smem:[#allocation0]]
  $region30: #{tpu_custom_call.1} parent=0
    _
  %s6 = ssub.s32 1, %s4
  %s7 = scalar_select 0, %s6, %s4
  $region1: #{tpu_custom_call.1} parent=0
    #allocation2 [shape = 'u8[4096]{0}', space=vmem, size = 0x1000, scoped, tag = 'input window, operand 0, single buffered']
    #allocation3 [shape = 's32[1]{0}', space=sflag, size = 0x4, scoped, tag = 'scoped memory for tpu_custom_call.1']
    #allocation4 [shape = 's32[1]{0}', space=sflag, size = 0x4, scoped, tag = 'scoped memory for tpu_custom_call.1']
    #allocation5 [shape = 'u8[65536]{0}', space=vmem, size = 0x10000, scoped, tag = 'input window, operand 1, single buffered']
    #allocation6 [shape = 's32[1]{0}', space=sflag, size = 0x4, scoped, tag = 'scoped memory for tpu_custom_call.1']
    #allocation7 [shape = 'u8[4096]{0}', space=vmem, size = 0x1000, scoped, tag = 'output window, operand 0, single buffered']
    %8 = vsyncpa [#allocation3], 0
    %9 = vsyncpa [#allocation6], 0
    %10 = vsyncpa [#allocation4], 0
    // Predicated region
    $region2: #{tpu_custom_call.1} parent=1 // pred_check
      _
    $region3: #{tpu_custom_call.1} parent=1 // pred_check_branch
      %12 = sbr.rel (0) target = $region5
    $region4: #{tpu_custom_call.1} parent=1 // pred_region
      %14 = vsyncadd [#allocation3], 0
      %s16 = sshll.u32 %s0, 4
      %s17 = int_to_ptr.hbm [resolvable:$true] %s16
      %s18 = sshll.u32 [#allocation2], 4
      %s19 = int_to_ptr.vmem [resolvable:$true] %s18
      %21 = dma.hbm_to_vmem [thread:$0]  %s17, 128, %s19, [#allocation3]
    $region5: #{tpu_custom_call.1} parent=1 // pred_fallthru
      _
    // Predicated region
    $region6: #{tpu_custom_call.1} parent=1 // pred_check
      _
    $region7: #{tpu_custom_call.1} parent=1 // pred_check_branch
      %23 = sbr.rel (0) target = $region9
    $region8: #{tpu_custom_call.1} parent=1 // pred_region
      %25 = vsyncadd [#allocation6], 0
      %s26 = sshll.u32 %s1, 4
      %s27 = int_to_ptr.hbm [resolvable:$true] %s26
      %s28 = sshll.u32 [#allocation5], 4
      %s29 = int_to_ptr.vmem [resolvable:$true] %s28
      %34 = dma.hbm_to_vmem [thread:$0]  %s27, 2048, %s29, [#allocation6], 128, 128, 8
    $region9: #{tpu_custom_call.1} parent=1 // pred_fallthru
      _
    // Predicated region
    $region10: #{tpu_custom_call.1} parent=1 // pred_check
      _
    $region11: #{tpu_custom_call.1} parent=1 // pred_check_branch
      %36 = sbr.rel (0) target = $region13
    $region12: #{tpu_custom_call.1} parent=1 // pred_region
      _
    $region13: #{tpu_custom_call.1} parent=1 // pred_fallthru
      _
    // Predicated region
    $region14: #{tpu_custom_call.1} parent=1 // pred_check
      _
    $region15: #{tpu_custom_call.1} parent=1 // pred_check_branch
      %38 = sbr.rel (0) target = $region17
    $region16: #{tpu_custom_call.1} parent=1 // pred_region
      %40 = dma.done [#allocation3], 128
    $region17: #{tpu_custom_call.1} parent=1 // pred_fallthru
      _
    // Predicated region
    $region18: #{tpu_custom_call.1} parent=1 // pred_check
      _
    $region19: #{tpu_custom_call.1} parent=1 // pred_check_branch
      %42 = sbr.rel (0) target = $region21
    $region20: #{tpu_custom_call.1} parent=1 // pred_region
      %44 = dma.done [#allocation6], 2048
    $region21: #{tpu_custom_call.1} parent=1 // pred_fallthru
      _
    %v45 = vld [vmem:[#allocation2] sm:$0xff]
    %v46 = vld [vmem:[#allocation5] sm:$0xff]
    %v47 = vld [vmem:[#allocation5 + $0x8] sm:$0xff]
    %v48 = vld [vmem:[#allocation5 + $0x10] sm:$0xff]
    %v49 = vld [vmem:[#allocation5 + $0x18] sm:$0xff]
    %v50 = vld [vmem:[#allocation5 + $0x20] sm:$0xff]
    %v51 = vld [vmem:[#allocation5 + $0x28] sm:$0xff]
    %v52 = vld [vmem:[#allocation5 + $0x30] sm:$0xff]
    %v53 = vld [vmem:[#allocation5 + $0x38] sm:$0xff]
    %v54 = vld [vmem:[#allocation5 + $0x40] sm:$0xff]
    %v55 = vld [vmem:[#allocation5 + $0x48] sm:$0xff]
    %v56 = vld [vmem:[#allocation5 + $0x50] sm:$0xff]
    %v57 = vld [vmem:[#allocation5 + $0x58] sm:$0xff]
    %v58 = vld [vmem:[#allocation5 + $0x60] sm:$0xff]
    %v59 = vld [vmem:[#allocation5 + $0x68] sm:$0xff]
    %v60 = vld [vmem:[#allocation5 + $0x70] sm:$0xff]
    %v61 = vld [vmem:[#allocation5 + $0x78] sm:$0xff]
    %v62 = vld [vmem:[%s2] sm:$0x1]
    %v64 = vperm.slane %v62, 0
    %66 = vmatpush.msra.mxu0 %v61
    %67 = vmatpush.msra.mxu0 %v60
    %68 = vmatpush.msra.mxu0 %v59
    %69 = vmatpush.msra.mxu0 %v58
    %70 = vmatpush.msra.mxu0 %v57
    %71 = vmatpush.msra.mxu0 %v56
    %72 = vmatpush.msra.mxu0 %v55
    %73 = vmatpush.msra.mxu0 %v54
    %74 = vmatpush.msra.mxu0 %v53
    %75 = vmatpush.msra.mxu0 %v52
    %76 = vmatpush.msra.mxu0 %v51
    %77 = vmatpush.msra.mxu0 %v50
    %78 = vmatpush.msra.mxu0 %v49
    %79 = vmatpush.msra.mxu0 %v48
    %80 = vmatpush.msra.mxu0 %v47
    %81 = vmatpush.msra.mxu0 %v46
    %82 = vmatmul.f32.gmra.mxu0 %v45
    %v83 = vpop.f32.mrf.mxu0
    %v84 = vadd.f32 %v64, %v83
    %85 = vdwg.mxu0
    %86 = vst [vmem:[#allocation7] sm:$0xff] %v84
    // Predicated region
    $region22: #{tpu_custom_call.1} parent=1 // pred_check
      _
    $region23: #{tpu_custom_call.1} parent=1 // pred_check_branch
      %88 = sbr.rel (0) target = $region25
    $region24: #{tpu_custom_call.1} parent=1 // pred_region
      %90 = vsyncadd [#allocation4], 0
      %s92 = sshll.u32 [#allocation7], 4
      %s93 = int_to_ptr.vmem [resolvable:$true] %s92
      %s94 = sshll.u32 %s3, 4
      %s95 = int_to_ptr.hbm [resolvable:$true] %s94
      %97 = dma.vmem_to_hbm [thread:$0]  %s93, 128, %s95, [#allocation4]
    $region25: #{tpu_custom_call.1} parent=1 // pred_fallthru
      _
    // Predicated region
    $region26: #{tpu_custom_call.1} parent=1 // pred_check
      _
    $region27: #{tpu_custom_call.1} parent=1 // pred_check_branch
      %99 = sbr.rel (0) target = $region29
    $region28: #{tpu_custom_call.1} parent=1 // pred_region
      %101 = dma.done [#allocation4], 128
    $region29: #{tpu_custom_call.1} parent=1 // pred_fallthru
      _
    %102 = vsyncpa [#allocation3], 1
    %103 = vsyncpa [#allocation6], 1
    %104 = vsyncpa [#allocation4], 1

</llo_original>
